<compile_context>
chip_gen: v7x
topology: tpu7x:2x2x1
jax: 0.10.0
libtpu: 0.0.40
codegen_flags: <defaults>
</compile_context>

<pallas_src>
import functools

import jax
import jax.numpy as jnp
from jax.experimental import pallas as pl
from jax.experimental.pallas import tpu as pltpu

# CLIP image-normalization constants (from the reference module).
_CLIP_MEAN = (0.48145466, 0.4578275, 0.40821073)
_CLIP_STD = (0.26862954, 0.26130258, 0.27577711)


def _round_up(x, m):
    return (x + m - 1) // m * m


def _clip_sim_kernel(img_ref, w_ref, b_ref, txt_t_ref, sim_ref, acc_ref):
    """One (batch-tile i, reduction-tile k) step.

    img_ref:   [TB, TF]        bf16 raw image tile (CLIP normalize folded into W')
    w_ref:     [TF, D_pad]     bf16 folded encoder-weight tile
    b_ref:     [1,  D_pad]     f32  folded normalization bias (grid-invariant)
    txt_t_ref: [D_pad, T_pad]  bf16 L2-normalized text features^T (grid-invariant)
    sim_ref:   [TB, T_pad]     f32  cosine similarities (lane-dense output)
    acc_ref:   [TB, D_pad]     f32  feature accumulator (scratch, persists over k)
    """
    k = pl.program_id(1)

    @pl.when(k == 0)
    def _init():
        acc_ref[...] = jnp.zeros_like(acc_ref)

    # bf16 MXU matmul, f32 accumulation.
    acc_ref[...] += jnp.dot(img_ref[...], w_ref[...],
                            preferred_element_type=jnp.float32)

    @pl.when(k == pl.num_programs(1) - 1)
    def _finalize():
        feat = acc_ref[...] + b_ref[...]                       # [TB, D_pad]
        sumsq = jnp.sum(feat * feat, axis=-1, keepdims=True)   # [TB, 1]
        feat = feat * jax.lax.rsqrt(sumsq + 1e-12)             # L2 normalize (EUP)
        # For unit vectors ||t - f||^2 = 2 - 2<t,f>: one small bf16 MXU matmul.
        sim_ref[...] = jnp.dot(feat.astype(jnp.bfloat16), txt_t_ref[...],
                               preferred_element_type=jnp.float32)


def prepare_clip_state(w_enc, text_features, *, tile_f=4096):
    """One-time weight prep (hoisted out of the steady-state forward path).

    w_enc:         [F, D] f32 stand-in linear image-encoder weights (F = H*W*3)
    text_features: [T, D] f32, already L2-normalized
    Returns device arrays in their final kernel layouts plus static config.
    """
    assert tile_f % 128 == 0
    F, D = w_enc.shape
    assert F % 3 == 0, "expects NHWC flatten with C=3 innermost"
    T, D_t = text_features.shape
    assert D_t == D

    # Fold CLIP normalization into the encoder:  (x-mean)/std @ W = x @ W' + b
    mean_flat = jnp.tile(jnp.asarray(_CLIP_MEAN, jnp.float32), F // 3)   # [F]
    std_flat = jnp.tile(jnp.asarray(_CLIP_STD, jnp.float32), F // 3)     # [F]
    w_f32 = w_enc.astype(jnp.float32)
    w_prime = w_f32 / std_flat[:, None]                       # [F, D]
    bias = (-(mean_flat / std_flat) @ w_f32).reshape(1, D)    # [1, D] f32

    # Lane-dense padded layouts (last dims multiples of 128).
    D_pad = _round_up(D, 128)
    T_pad = _round_up(T, 128)
    F_pad = _round_up(F, 128)
    if F_pad <= tile_f:
        TF = F_pad
    else:
        TF = tile_f
        F_pad = _round_up(F, TF)

    w_p = jnp.zeros((F_pad, D_pad), jnp.bfloat16).at[:F, :D].set(
        w_prime.astype(jnp.bfloat16))
    bias_p = jnp.zeros((1, D_pad), jnp.float32).at[:, :D].set(bias)
    # Text features stored pre-transposed in bf16: single-pass MXU finalize.
    txt_t = jnp.zeros((D_pad, T_pad), jnp.bfloat16).at[:D, :T].set(
        text_features.astype(jnp.bfloat16).T)

    return {
        "w_p": jax.device_put(w_p),
        "bias": jax.device_put(bias_p),
        "txt_t": jax.device_put(txt_t),
        "num_text": T,
        "tf_block": TF,
    }


@functools.partial(jax.jit, static_argnames=("num_text", "tf_block", "tile_b"))
def clip_loss_forward(img_nhwc, w_p, bias, txt_t, *,
                      num_text, tf_block, tile_b=512):
    """Pallas-backed equivalent of ClipLoss.forward (with synthetic encoder).

    img_nhwc: [B, H, W, 3] float32 in [0, 1]
    w_p/bias/txt_t: pre-folded / pre-padded arrays from prepare_clip_state.
    Returns a scalar loss (float32).
    """
    B, H, W, C = img_nhwc.shape
    F = H * W * C
    F_pad, D_pad = w_p.shape
    _, T_pad = txt_t.shape
    TF = tf_block
    assert F_pad % TF == 0 and F <= F_pad

    # Batch tiling: large tiles (the W' stream is the roofline limiter), but
    # keep >= 2 batch tiles when B is large so both v7x TensorCores are busy.
    B8 = _round_up(B, 8)
    if B8 <= tile_b:
        TB = B8
    else:
        TB = min(tile_b, _round_up(B8 // 2, 8))
    B_pad = _round_up(B, TB)

    # Image to bf16; skip the pad copy when shapes are already aligned
    # (e.g. B % 8 == 0 and F = 224*224*3, which is 128-aligned).
    img_flat = img_nhwc.reshape(B, F)
    if B_pad == B and F_pad == F:
        img_p = img_flat.astype(jnp.bfloat16)
    else:
        img_p = jnp.zeros((B_pad, F_pad), jnp.bfloat16).at[:B, :F].set(
            img_flat.astype(jnp.bfloat16))

    grid = (B_pad // TB, F_pad // TF)

    # VMEM budget: double-buffered img / W / out, single-buffered invariants,
    # plus the f32 accumulator.  Cap at ~56 MiB so v7x (64 MiB) never spills.
    vmem_bytes = (2 * TB * TF * 2            # image tiles (bf16)
                  + 2 * TF * D_pad * 2       # weight tiles (bf16)
                  + D_pad * 4                # bias (f32, Buffered(1))
                  + D_pad * T_pad * 2        # text^T (bf16, Buffered(1))
                  + 2 * TB * T_pad * 4       # output tiles (f32)
                  + TB * D_pad * 4)          # accumulator scratch (f32)
    vmem_limit = int(max(16 << 20, min(vmem_bytes + (8 << 20), 56 << 20)))

    sim_p = pl.pallas_call(
        _clip_sim_kernel,
        out_shape=jax.ShapeDtypeStruct((B_pad, T_pad), jnp.float32),
        grid_spec=pltpu.PrefetchScalarGridSpec(
            num_scalar_prefetch=0,
            grid=grid,
            in_specs=[
                pl.BlockSpec((TB, TF), lambda i, k: (i, k)),      # image tile
                pl.BlockSpec((TF, D_pad), lambda i, k: (k, 0)),   # weight tile
                pl.BlockSpec((1, D_pad), lambda i, k: (0, 0),
                             pipeline_mode=pl.Buffered(1)),       # bias (invariant)
                pl.BlockSpec((D_pad, T_pad), lambda i, k: (0, 0),
                             pipeline_mode=pl.Buffered(1)),       # text^T (invariant)
            ],
            out_specs=pl.BlockSpec((TB, T_pad), lambda i, k: (i, 0)),
            scratch_shapes=[pltpu.VMEM((TB, D_pad), jnp.float32)],
        ),
        compiler_params=pltpu.CompilerParams(
            dimension_semantics=("parallel", "arbitrary"),
            vmem_limit_bytes=vmem_limit,
        ),
    )(img_p, w_p, bias, txt_t)

    # Tiny [B, T] epilogue in glue (matches .div(2).arcsin().pow(2).mul(2).mean()).
    sim = sim_p[:B, :num_text]                          # [B, T]
    d2 = jnp.clip(2.0 - 2.0 * sim, 0.0, 4.0)            # squared chord distance
    half = jnp.clip(jnp.sqrt(d2) * 0.5, 0.0, 1.0)       # guard arcsin domain
    return jnp.mean(2.0 * jnp.square(jnp.arcsin(half)))


if __name__ == "__main__":
    # Small deterministic shapes consistent with forward(img: [batch, N, M, 3]).
    B, H, W, C = 2, 16, 16, 3
    D = 32        # feature dim of the stand-in image/text encoder
    T = 2         # number of text prompts

    key = jax.random.PRNGKey(0)
    k_img, k_w, k_txt = jax.random.split(key, 3)

    img = jax.random.uniform(k_img, (B, H, W, C), dtype=jnp.float32)

    # Deterministic synthetic "encoder" weights and unit-norm text features.
    w_enc = (jax.random.normal(k_w, (H * W * C, D), dtype=jnp.float32)
             / jnp.sqrt(jnp.float32(H * W * C)))
    txt = jax.random.normal(k_txt, (T, D), dtype=jnp.float32)
    txt = txt / jnp.linalg.norm(txt, axis=-1, keepdims=True)  # F.normalize

    # One-time (hoisted) weight prep, then the steady-state forward.
    state = prepare_clip_state(w_enc, txt)
    loss = clip_loss_forward(img, state["w_p"], state["bias"], state["txt_t"],
                             num_text=state["num_text"],
                             tf_block=state["tf_block"])
    jax.block_until_ready(loss)

    assert loss.shape == () and bool(jnp.isfinite(loss))
    print("KERNEL_OK")
</pallas_src>

<mosaic_0001>
module attributes {stable_mosaic.version = 11 : i64} {
  func.func @_clip_sim_kernel(%arg0: i32, %arg1: i32, %arg2: memref<8x768xbf16, #tpu.memory_space<vmem>>, %arg3: memref<768x128xbf16, #tpu.memory_space<vmem>>, %arg4: memref<1x128xf32, #tpu.memory_space<vmem>>, %arg5: memref<128x128xbf16, #tpu.memory_space<vmem>>, %arg6: memref<8x128xf32, #tpu.memory_space<vmem>>, %arg7: memref<8x128xf32, #tpu.memory_space<vmem>>) attributes {dimension_semantics = [#tpu.dimension_semantics<parallel>, #tpu.dimension_semantics<arbitrary>], iteration_bounds = array<i64: 1, 1>, scalar_prefetch = 0 : i64, scratch_operands = 1 : i64, tpu.core_type = #tpu.core_type<tc>, window_params = [{transform_indices = @transform_0, window_bounds = array<i64: 8, 768>}, {transform_indices = @transform_1, window_bounds = array<i64: 768, 128>}, {pipeline_mode = #tpu.pipeline_mode<synchronous>, transform_indices = @transform_2, window_bounds = array<i64: 1, 128>}, {pipeline_mode = #tpu.pipeline_mode<synchronous>, transform_indices = @transform_3, window_bounds = array<i64: 128, 128>}, {transform_indices = @transform_4, window_bounds = array<i64: 8, 128>}]} {
    %c0_i32 = arith.constant 0 : i32
    %0 = arith.cmpi eq, %arg1, %c0_i32 : i32
    %1 = arith.extui %0 : i1 to i32
    %c0_i32_0 = arith.constant 0 : i32
    %2 = arith.cmpi ne, %1, %c0_i32_0 : i32
    scf.if %2 {
      %cst_10 = arith.constant 0.000000e+00 : f32
      %12 = vector.broadcast %cst_10 : f32 to vector<8x128xf32>
      %c0_11 = arith.constant 0 : index
      %c0_12 = arith.constant 0 : index
      %13 = vector.load %arg7[%c0_11, %c0_12] : memref<8x128xf32, #tpu.memory_space<vmem>>, vector<8x128xf32>
      tpu.vector_store %arg7[%c0_11, %c0_12], %12 {strides = array<i32>} : memref<8x128xf32, #tpu.memory_space<vmem>>, vector<8x128xf32>,
    } else {
    }
    %c0 = arith.constant 0 : index
    %c0_1 = arith.constant 0 : index
    %3 = vector.load %arg7[%c0, %c0_1] : memref<8x128xf32, #tpu.memory_space<vmem>>, vector<8x128xf32>
    %c0_2 = arith.constant 0 : index
    %c0_3 = arith.constant 0 : index
    %4 = vector.load %arg2[%c0_2, %c0_3] : memref<8x768xbf16, #tpu.memory_space<vmem>>, vector<8x768xbf16>
    %c0_4 = arith.constant 0 : index
    %c0_5 = arith.constant 0 : index
    %5 = vector.load %arg3[%c0_4, %c0_5] : memref<768x128xbf16, #tpu.memory_space<vmem>>, vector<768x128xbf16>
    %cst = arith.constant dense<0.000000e+00> : vector<8x128xf32>
    %6 = tpu.matmul %4, %5, %cst {dimension_numbers = #tpu.dot_dimension_numbers<[1], [0], [0], [1], [0, 0, 1, 1], [], []>} : vector<8x768xbf16>, vector<768x128xbf16>, vector<8x128xf32> -> vector<8x128xf32>
    %7 = arith.addf %3, %6 : vector<8x128xf32>
    %c0_6 = arith.constant 0 : index
    %c0_7 = arith.constant 0 : index
    %8 = vector.load %arg7[%c0_6, %c0_7] : memref<8x128xf32, #tpu.memory_space<vmem>>, vector<8x128xf32>
    tpu.vector_store %arg7[%c0_6, %c0_7], %7 {strides = array<i32>} : memref<8x128xf32, #tpu.memory_space<vmem>>, vector<8x128xf32>,
    %c0_i32_8 = arith.constant 0 : i32
    %9 = arith.cmpi eq, %arg1, %c0_i32_8 : i32
    %10 = arith.extui %9 : i1 to i32
    %c0_i32_9 = arith.constant 0 : i32
    %11 = arith.cmpi ne, %10, %c0_i32_9 : i32
    scf.if %11 {
      %c0_10 = arith.constant 0 : index
      %c0_11 = arith.constant 0 : index
      %12 = vector.load %arg7[%c0_10, %c0_11] : memref<8x128xf32, #tpu.memory_space<vmem>>, vector<8x128xf32>
      %c0_12 = arith.constant 0 : index
      %c0_13 = arith.constant 0 : index
      %13 = vector.load %arg4[%c0_12, %c0_13] : memref<1x128xf32, #tpu.memory_space<vmem>>, vector<1x128xf32>
      %14 = vector.broadcast %13 : vector<1x128xf32> to vector<8x128xf32>
      %15 = arith.addf %12, %14 : vector<8x128xf32>
      %16 = arith.mulf %15, %15 : vector<8x128xf32>
      %cst_14 = arith.constant dense<0.000000e+00> : vector<8xf32>
      %17 = vector.multi_reduction <add>, %16, %cst_14 [1] : vector<8x128xf32> to vector<8xf32>
      %18 = vector.shape_cast %17 : vector<8xf32> to vector<8x1xf32>
      %cst_15 = arith.constant 9.99999996E-13 : f32
      %19 = vector.broadcast %cst_15 : f32 to vector<8x1xf32>
      %20 = arith.addf %18, %19 : vector<8x1xf32>
      %21 = math.rsqrt %20 : vector<8x1xf32>
      %22 = vector.broadcast %21 : vector<8x1xf32> to vector<8x128xf32>
      %23 = arith.mulf %15, %22 : vector<8x128xf32>
      %24 = arith.truncf %23 : vector<8x128xf32> to vector<8x128xbf16>
      %c0_16 = arith.constant 0 : index
      %c0_17 = arith.constant 0 : index
      %25 = vector.load %arg5[%c0_16, %c0_17] : memref<128x128xbf16, #tpu.memory_space<vmem>>, vector<128x128xbf16>
      %cst_18 = arith.constant dense<0.000000e+00> : vector<8x128xf32>
      %26 = tpu.matmul %24, %25, %cst_18 {dimension_numbers = #tpu.dot_dimension_numbers<[1], [0], [0], [1], [0, 0, 1, 1], [], []>} : vector<8x128xbf16>, vector<128x128xbf16>, vector<8x128xf32> -> vector<8x128xf32>
      %c0_19 = arith.constant 0 : index
      %c0_20 = arith.constant 0 : index
      %27 = vector.load %arg6[%c0_19, %c0_20] : memref<8x128xf32, #tpu.memory_space<vmem>>, vector<8x128xf32>
      tpu.vector_store %arg6[%c0_19, %c0_20], %26 {strides = array<i32>} : memref<8x128xf32, #tpu.memory_space<vmem>>, vector<8x128xf32>,
    } else {
    }
    return
  }
  func.func @transform_0(%arg0: i32, %arg1: i32) -> (i32, i32) {
    %c0_i32 = arith.constant 0 : i32
    return %arg0, %arg1 : i32, i32
  }
  func.func @transform_1(%arg0: i32, %arg1: i32) -> (i32, i32) {
    %c0_i32 = arith.constant 0 : i32
    %c0_i32_0 = arith.constant 0 : i32
    return %arg1, %c0_i32 : i32, i32
  }
  func.func @transform_2(%arg0: i32, %arg1: i32) -> (i32, i32) {
    %c0_i32 = arith.constant 0 : i32
    %c0_i32_0 = arith.constant 0 : i32
    %c0_i32_1 = arith.constant 0 : i32
    return %c0_i32, %c0_i32_0 : i32, i32
  }
  func.func @transform_3(%arg0: i32, %arg1: i32) -> (i32, i32) {
    %c0_i32 = arith.constant 0 : i32
    %c0_i32_0 = arith.constant 0 : i32
    %c0_i32_1 = arith.constant 0 : i32
    return %c0_i32, %c0_i32_0 : i32, i32
  }
  func.func @transform_4(%arg0: i32, %arg1: i32) -> (i32, i32) {
    %c0_i32 = arith.constant 0 : i32
    %c0_i32_0 = arith.constant 0 : i32
    return %arg0, %c0_i32 : i32, i32
  }
}

</mosaic_0001>

<llo_original>
// kernel: clip_loss_forward.1
$region0: #{clip_loss_forward.1}
  #allocation0 [shape = 'u32[]', space=smem, size = 0x4, offset = 0x4, fixed_abs, tag = 'smem constant byte address 0x4 - core index']
  #allocation1 [shape = 'u32[144,128]{1,0:T(1,128)}', space=vmem, size = 0x12000, scoped, tag = 'internal scratch']
  #allocation2 [shape = 'f32[8,128]{1,0:T(8,128)}', space=vmem, size = 0x1000, scoped, tag = 'scratch operand']
  %s0 = inlined_call_operand.vmem [shape: bf16[8,768], index: 0, kind: input, shape index: {}]
  %s1 = inlined_call_operand.vmem [shape: bf16[768,128], index: 1, kind: input, shape index: {}]
  %s2 = inlined_call_operand.vmem [shape: f32[1,128], index: 2, kind: input, shape index: {}]
  %s3 = inlined_call_operand.vmem [shape: bf16[128,128], index: 3, kind: input, shape index: {}]
  %s4 = inlined_call_operand.vmem [shape: f32[8,128], index: 4, kind: output, shape index: {}]
  %s5 = sld [smem:[#allocation0]]
  $region34: #{clip_loss_forward.1} parent=0
    _
  %s7 = ssub.s32 1, %s5
  %s8 = scalar_select 0, %s7, %s5
  // Predicated region
  $region2: #{clip_loss_forward.1} parent=0 // pred_check
    _
  $region3: #{clip_loss_forward.1} parent=0 // pred_check_branch
    %10 = sbr.rel (0) target = $region5
  $region4: #{clip_loss_forward.1} parent=0 // pred_region
    _
  $region5: #{clip_loss_forward.1} parent=0 // pred_fallthru
    _
  // Predicated region
  $region6: #{clip_loss_forward.1} parent=0 // pred_check
    _
  $region7: #{clip_loss_forward.1} parent=0 // pred_check_branch
    %12 = sbr.rel (0) target = $region9
  $region8: #{clip_loss_forward.1} parent=0 // pred_region
    _
  $region9: #{clip_loss_forward.1} parent=0 // pred_fallthru
    _
  // Predicated region
  $region10: #{clip_loss_forward.1} parent=0 // pred_check
    _
  $region11: #{clip_loss_forward.1} parent=0 // pred_check_branch
    %14 = sbr.rel (0) target = $region13
  $region12: #{clip_loss_forward.1} parent=0 // pred_region
    _
  $region13: #{clip_loss_forward.1} parent=0 // pred_fallthru
    _
  // Predicated region
  $region14: #{clip_loss_forward.1} parent=0 // pred_check
    _
  $region15: #{clip_loss_forward.1} parent=0 // pred_check_branch
    %16 = sbr.rel (0) target = $region17
  $region16: #{clip_loss_forward.1} parent=0 // pred_region
    _
  $region17: #{clip_loss_forward.1} parent=0 // pred_fallthru
    _
  %p18 = scmp.eq.s32.totalorder 0, 0
  // Predicated region
  $region18: #{clip_loss_forward.1} parent=0 // pred_check
    %p19 = pneg %p18
  $region19: #{clip_loss_forward.1} parent=0 // pred_check_branch
    %21 = sbr.rel (%p19) target = $region21
  $region20: #{clip_loss_forward.1} parent=0 // pred_region
    %22 = vst [vmem:[#allocation2] sm:$0xff] 0.0
  $region21: #{clip_loss_forward.1} parent=0 // pred_fallthru
    _
  %v23 = vld [vmem:[#allocation2] sm:$0xff]
  %v24 = vld [vmem:[%s0] sm:$0xff]
  %v25 = vld [vmem:[%s0 + $0x8] sm:$0xff]
  %v26 = vld [vmem:[%s0 + $0x10] sm:$0xff]
  %v27 = vld [vmem:[%s1] sm:$0xf]
  %v28 = vld [vmem:[%s1 + $0x4] sm:$0xf]
  %v29 = vld [vmem:[%s1 + $0x8] sm:$0xf]
  %v30 = vld [vmem:[%s1 + $0xc] sm:$0xf]
  %v31 = vld [vmem:[%s1 + $0x10] sm:$0xf]
  %v32 = vld [vmem:[%s1 + $0x14] sm:$0xf]
  %v33 = vld [vmem:[%s1 + $0x18] sm:$0xf]
  %v34 = vld [vmem:[%s1 + $0x1c] sm:$0xf]
  %v35 = vld [vmem:[%s1 + $0x20] sm:$0xf]
  %v36 = vld [vmem:[%s1 + $0x24] sm:$0xf]
  %v37 = vld [vmem:[%s1 + $0x28] sm:$0xf]
  %v38 = vld [vmem:[%s1 + $0x2c] sm:$0xf]
  %v39 = vld [vmem:[%s1 + $0x30] sm:$0xf]
  %v40 = vld [vmem:[%s1 + $0x34] sm:$0xf]
  %v41 = vld [vmem:[%s1 + $0x38] sm:$0xf]
  %v42 = vld [vmem:[%s1 + $0x3c] sm:$0xf]
  %v43 = vld [vmem:[%s1 + $0x40] sm:$0xf]
  %v44 = vld [vmem:[%s1 + $0x44] sm:$0xf]
  %v45 = vld [vmem:[%s1 + $0x48] sm:$0xf]
  %v46 = vld [vmem:[%s1 + $0x4c] sm:$0xf]
  %v47 = vld [vmem:[%s1 + $0x50] sm:$0xf]
  %v48 = vld [vmem:[%s1 + $0x54] sm:$0xf]
  %v49 = vld [vmem:[%s1 + $0x58] sm:$0xf]
  %v50 = vld [vmem:[%s1 + $0x5c] sm:$0xf]
  %v51 = vld [vmem:[%s1 + $0x60] sm:$0xf]
  %v52 = vld [vmem:[%s1 + $0x64] sm:$0xf]
  %v53 = vld [vmem:[%s1 + $0x68] sm:$0xf]
  %v54 = vld [vmem:[%s1 + $0x6c] sm:$0xf]
  %v55 = vld [vmem:[%s1 + $0x70] sm:$0xf]
  %v56 = vld [vmem:[%s1 + $0x74] sm:$0xf]
  %v57 = vld [vmem:[%s1 + $0x78] sm:$0xf]
  %v58 = vld [vmem:[%s1 + $0x7c] sm:$0xf]
  %v59 = vld [vmem:[%s1 + $0x80] sm:$0xf]
  %v60 = vld [vmem:[%s1 + $0x84] sm:$0xf]
  %v61 = vld [vmem:[%s1 + $0x88] sm:$0xf]
  %v62 = vld [vmem:[%s1 + $0x8c] sm:$0xf]
  %v63 = vld [vmem:[%s1 + $0x90] sm:$0xf]
  %v64 = vld [vmem:[%s1 + $0x94] sm:$0xf]
  %v65 = vld [vmem:[%s1 + $0x98] sm:$0xf]
  %v66 = vld [vmem:[%s1 + $0x9c] sm:$0xf]
  %v67 = vld [vmem:[%s1 + $0xa0] sm:$0xf]
  %v68 = vld [vmem:[%s1 + $0xa4] sm:$0xf]
  %v69 = vld [vmem:[%s1 + $0xa8] sm:$0xf]
  %v70 = vld [vmem:[%s1 + $0xac] sm:$0xf]
  %v71 = vld [vmem:[%s1 + $0xb0] sm:$0xf]
  %v72 = vld [vmem:[%s1 + $0xb4] sm:$0xf]
  %v73 = vld [vmem:[%s1 + $0xb8] sm:$0xf]
  %v74 = vld [vmem:[%s1 + $0xbc] sm:$0xf]
  %v75 = vld [vmem:[%s1 + $0xc0] sm:$0xf]
  %v76 = vld [vmem:[%s1 + $0xc4] sm:$0xf]
  %v77 = vld [vmem:[%s1 + $0xc8] sm:$0xf]
  %v78 = vld [vmem:[%s1 + $0xcc] sm:$0xf]
  %v79 = vld [vmem:[%s1 + $0xd0] sm:$0xf]
  %v80 = vld [vmem:[%s1 + $0xd4] sm:$0xf]
  %v81 = vld [vmem:[%s1 + $0xd8] sm:$0xf]
  %v82 = vld [vmem:[%s1 + $0xdc] sm:$0xf]
  %v83 = vld [vmem:[%s1 + $0xe0] sm:$0xf]
  %v84 = vld [vmem:[%s1 + $0xe4] sm:$0xf]
  %v85 = vld [vmem:[%s1 + $0xe8] sm:$0xf]
  %v86 = vld [vmem:[%s1 + $0xec] sm:$0xf]
  %v87 = vld [vmem:[%s1 + $0xf0] sm:$0xf]
  %v88 = vld [vmem:[%s1 + $0xf4] sm:$0xf]
  %v89 = vld [vmem:[%s1 + $0xf8] sm:$0xf]
  %v90 = vld [vmem:[%s1 + $0xfc] sm:$0xf]
  %v91 = vld [vmem:[%s1 + $0x100] sm:$0xf]
  %v92 = vld [vmem:[%s1 + $0x104] sm:$0xf]
  %v93 = vld [vmem:[%s1 + $0x108] sm:$0xf]
  %v94 = vld [vmem:[%s1 + $0x10c] sm:$0xf]
  %v95 = vld [vmem:[%s1 + $0x110] sm:$0xf]
  %v96 = vld [vmem:[%s1 + $0x114] sm:$0xf]
  %v97 = vld [vmem:[%s1 + $0x118] sm:$0xf]
  %v98 = vld [vmem:[%s1 + $0x11c] sm:$0xf]
  %v99 = vld [vmem:[%s1 + $0x120] sm:$0xf]
  %v100 = vld [vmem:[%s1 + $0x124] sm:$0xf]
  %v101 = vld [vmem:[%s1 + $0x128] sm:$0xf]
  %v102 = vld [vmem:[%s1 + $0x12c] sm:$0xf]
  %v103 = vld [vmem:[%s1 + $0x130] sm:$0xf]
  %v104 = vld [vmem:[%s1 + $0x134] sm:$0xf]
  %v105 = vld [vmem:[%s1 + $0x138] sm:$0xf]
  %v106 = vld [vmem:[%s1 + $0x13c] sm:$0xf]
  %v107 = vld [vmem:[%s1 + $0x140] sm:$0xf]
  %v108 = vld [vmem:[%s1 + $0x144] sm:$0xf]
  %v109 = vld [vmem:[%s1 + $0x148] sm:$0xf]
  %v110 = vld [vmem:[%s1 + $0x14c] sm:$0xf]
  %v111 = vld [vmem:[%s1 + $0x150] sm:$0xf]
  %v112 = vld [vmem:[%s1 + $0x154] sm:$0xf]
  %v113 = vld [vmem:[%s1 + $0x158] sm:$0xf]
  %v114 = vld [vmem:[%s1 + $0x15c] sm:$0xf]
  %v115 = vld [vmem:[%s1 + $0x160] sm:$0xf]
  %v116 = vld [vmem:[%s1 + $0x164] sm:$0xf]
  %v117 = vld [vmem:[%s1 + $0x168] sm:$0xf]
  %v118 = vld [vmem:[%s1 + $0x16c] sm:$0xf]
  %v119 = vld [vmem:[%s1 + $0x170] sm:$0xf]
  %v120 = vld [vmem:[%s1 + $0x174] sm:$0xf]
  %v121 = vld [vmem:[%s1 + $0x178] sm:$0xf]
  %v122 = vld [vmem:[%s1 + $0x17c] sm:$0xf]
  %v126 = vunpack.c.l.b16 %v24
  %v127 = vunpack.c.h.b16 %v24
  %v128 = vunpack.c.l.b16 %v25
  %v129 = vunpack.c.h.b16 %v25
  %v130 = vunpack.c.l.b16 %v26
  %v131 = vunpack.c.h.b16 %v26
  %v132 = vpack.c.b16 %v126, %v126
  %v133 = vpack.c.b16 %v127, %v127
  %v134 = vpack.c.b16 %v128, %v128
  %v135 = vpack.c.b16 %v129, %v129
  %v136 = vpack.c.b16 %v130, %v130
  %v137 = vpack.c.b16 %v131, %v131
  %v240 = vunpack.c.l.b16 %v27
  %v241 = vunpack.c.l.b16 %v28
  %v242 = vunpack.c.l.b16 %v29
  %v243 = vunpack.c.l.b16 %v30
  %v244 = vunpack.c.l.b16 %v31
  %v245 = vunpack.c.l.b16 %v32
  %v246 = vunpack.c.l.b16 %v33
  %v247 = vunpack.c.l.b16 %v34
  %v248 = vunpack.c.l.b16 %v35
  %v249 = vunpack.c.l.b16 %v36
  %v250 = vunpack.c.l.b16 %v37
  %v251 = vunpack.c.l.b16 %v38
  %v252 = vunpack.c.l.b16 %v39
  %v253 = vunpack.c.l.b16 %v40
  %v254 = vunpack.c.l.b16 %v41
  %v255 = vunpack.c.l.b16 %v42
  %v256 = vunpack.c.l.b16 %v43
  %v257 = vunpack.c.l.b16 %v44
  %v258 = vunpack.c.l.b16 %v45
  %v259 = vunpack.c.l.b16 %v46
  %v260 = vunpack.c.l.b16 %v47
  %v261 = vunpack.c.l.b16 %v48
  %v262 = vunpack.c.l.b16 %v49
  %v263 = vunpack.c.l.b16 %v50
  %v264 = vunpack.c.l.b16 %v51
  %v265 = vunpack.c.l.b16 %v52
  %v266 = vunpack.c.l.b16 %v53
  %v267 = vunpack.c.l.b16 %v54
  %v268 = vunpack.c.l.b16 %v55
  %v269 = vunpack.c.l.b16 %v56
  %v270 = vunpack.c.l.b16 %v57
  %v271 = vunpack.c.l.b16 %v58
  %v272 = vunpack.c.l.b16 %v59
  %v273 = vunpack.c.l.b16 %v60
  %v274 = vunpack.c.l.b16 %v61
  %v275 = vunpack.c.l.b16 %v62
  %v276 = vunpack.c.l.b16 %v63
  %v277 = vunpack.c.l.b16 %v64
  %v278 = vunpack.c.l.b16 %v65
  %v279 = vunpack.c.l.b16 %v66
  %v280 = vunpack.c.l.b16 %v67
  %v281 = vunpack.c.l.b16 %v68
  %v282 = vunpack.c.l.b16 %v69
  %v283 = vunpack.c.l.b16 %v70
  %v284 = vunpack.c.l.b16 %v71
  %v285 = vunpack.c.l.b16 %v72
  %v286 = vunpack.c.l.b16 %v73
  %v287 = vunpack.c.l.b16 %v74
  %v288 = vunpack.c.l.b16 %v75
  %v289 = vunpack.c.l.b16 %v76
  %v290 = vunpack.c.l.b16 %v77
  %v291 = vunpack.c.l.b16 %v78
  %v292 = vunpack.c.l.b16 %v79
  %v293 = vunpack.c.l.b16 %v80
  %v294 = vunpack.c.l.b16 %v81
  %v295 = vunpack.c.l.b16 %v82
  %v296 = vunpack.c.l.b16 %v83
  %v297 = vunpack.c.l.b16 %v84
  %v298 = vunpack.c.l.b16 %v85
  %v299 = vunpack.c.l.b16 %v86
  %v300 = vunpack.c.l.b16 %v87
  %v301 = vunpack.c.l.b16 %v88
  %v302 = vunpack.c.l.b16 %v89
  %v303 = vunpack.c.l.b16 %v90
  %v304 = vunpack.c.l.b16 %v91
  %v305 = vunpack.c.l.b16 %v92
  %v306 = vunpack.c.l.b16 %v93
  %v307 = vunpack.c.l.b16 %v94
  %v308 = vunpack.c.l.b16 %v95
  %v309 = vunpack.c.l.b16 %v96
  %v310 = vunpack.c.l.b16 %v97
  %v311 = vunpack.c.l.b16 %v98
  %v312 = vunpack.c.l.b16 %v99
  %v313 = vunpack.c.l.b16 %v100
  %v314 = vunpack.c.l.b16 %v101
  %v315 = vunpack.c.l.b16 %v102
  %v316 = vunpack.c.l.b16 %v103
  %v317 = vunpack.c.l.b16 %v104
  %v318 = vunpack.c.l.b16 %v105
  %v319 = vunpack.c.l.b16 %v106
  %v320 = vunpack.c.l.b16 %v107
  %v321 = vunpack.c.l.b16 %v108
  %v322 = vunpack.c.l.b16 %v109
  %v323 = vunpack.c.l.b16 %v110
  %v324 = vunpack.c.l.b16 %v111
  %v325 = vunpack.c.l.b16 %v112
  %v326 = vunpack.c.l.b16 %v113
  %v327 = vunpack.c.l.b16 %v114
  %v328 = vunpack.c.l.b16 %v115
  %v329 = vunpack.c.l.b16 %v116
  %v330 = vunpack.c.l.b16 %v117
  %v331 = vunpack.c.l.b16 %v118
  %v332 = vunpack.c.l.b16 %v119
  %v333 = vunpack.c.l.b16 %v120
  %v334 = vunpack.c.l.b16 %v121
  %v335 = vunpack.c.l.b16 %v122
  %v336 = vpack.c.b16 %v241, %v240
  %v337 = vpack.c.b16 %v243, %v242
  %v338 = vpack.c.b16 %v245, %v244
  %v339 = vpack.c.b16 %v247, %v246
  %v340 = vpack.c.b16 %v249, %v248
  %v341 = vpack.c.b16 %v251, %v250
  %v342 = vpack.c.b16 %v253, %v252
  %v343 = vpack.c.b16 %v255, %v254
  %v344 = vpack.c.b16 %v257, %v256
  %v345 = vpack.c.b16 %v259, %v258
  %v346 = vpack.c.b16 %v261, %v260
  %v347 = vpack.c.b16 %v263, %v262
  %v348 = vpack.c.b16 %v265, %v264
  %v349 = vpack.c.b16 %v267, %v266
  %v350 = vpack.c.b16 %v269, %v268
  %v351 = vpack.c.b16 %v271, %v270
  %v352 = vpack.c.b16 %v273, %v272
  %v353 = vpack.c.b16 %v275, %v274
  %v354 = vpack.c.b16 %v277, %v276
  %v355 = vpack.c.b16 %v279, %v278
  %v356 = vpack.c.b16 %v281, %v280
  %v357 = vpack.c.b16 %v283, %v282
  %v358 = vpack.c.b16 %v285, %v284
  %v359 = vpack.c.b16 %v287, %v286
  %v360 = vpack.c.b16 %v289, %v288
  %v361 = vpack.c.b16 %v291, %v290
  %v362 = vpack.c.b16 %v293, %v292
  %v363 = vpack.c.b16 %v295, %v294
  %v364 = vpack.c.b16 %v297, %v296
  %v365 = vpack.c.b16 %v299, %v298
  %v366 = vpack.c.b16 %v301, %v300
  %v367 = vpack.c.b16 %v303, %v302
  %v368 = vpack.c.b16 %v305, %v304
  %v369 = vpack.c.b16 %v307, %v306
  %v370 = vpack.c.b16 %v309, %v308
  %v371 = vpack.c.b16 %v311, %v310
  %v372 = vpack.c.b16 %v313, %v312
  %v373 = vpack.c.b16 %v315, %v314
  %v374 = vpack.c.b16 %v317, %v316
  %v375 = vpack.c.b16 %v319, %v318
  %v376 = vpack.c.b16 %v321, %v320
  %v377 = vpack.c.b16 %v323, %v322
  %v378 = vpack.c.b16 %v325, %v324
  %v379 = vpack.c.b16 %v327, %v326
  %v380 = vpack.c.b16 %v329, %v328
  %v381 = vpack.c.b16 %v331, %v330
  %v382 = vpack.c.b16 %v333, %v332
  %v383 = vpack.c.b16 %v335, %v334
  %432 = vmatprep.subr.bf16.mxu0 0
  %433 = vmatpush1.bf16.msra.mxu0 %v336
  %434 = vmatprep.subr.bf16.mxu0 0
  %435 = vmatpush1.bf16.msra.mxu0 %v337
  %436 = vmatprep.subr.bf16.mxu0 0
  %437 = vmatpush1.bf16.msra.mxu0 %v338
  %438 = vmatprep.subr.bf16.mxu0 0
  %439 = vmatpush1.bf16.msra.mxu0 %v339
  %440 = vmatprep.subr.bf16.mxu0 0
  %441 = vmatpush1.bf16.msra.mxu0 %v340
  %442 = vmatprep.subr.bf16.mxu0 0
  %443 = vmatpush1.bf16.msra.mxu0 %v341
  %444 = vmatprep.subr.bf16.mxu0 0
  %445 = vmatpush1.bf16.msra.mxu0 %v342
  %446 = vmatprep.subr.bf16.mxu0 0
  %447 = vmatpush1.bf16.msra.mxu0 %v343
  %448 = vmatprep.subr.bf16.mxu0 0
  %449 = vmatpush1.bf16.msra.mxu0 %v344
  %450 = vmatprep.subr.bf16.mxu0 0
  %451 = vmatpush1.bf16.msra.mxu0 %v345
  %452 = vmatprep.subr.bf16.mxu0 0
  %453 = vmatpush1.bf16.msra.mxu0 %v346
  %454 = vmatprep.subr.bf16.mxu0 0
  %455 = vmatpush1.bf16.msra.mxu0 %v347
  %456 = vmatprep.subr.bf16.mxu0 0
  %457 = vmatpush1.bf16.msra.mxu0 %v348
  %458 = vmatprep.subr.bf16.mxu0 0
  %459 = vmatpush1.bf16.msra.mxu0 %v349
  %460 = vmatprep.subr.bf16.mxu0 0
  %461 = vmatpush1.bf16.msra.mxu0 %v350
  %462 = vmatprep.subr.bf16.mxu0 0
  %463 = vmatpush1.bf16.msra.mxu0 %v351
  %464 = vmatprep.mubr.bf16.mxu0 %v133
  %465 = vmatmul.mubr.bf16.gmra.mrb[0].mxu0 %v132
  %v466 = vpop.f32.mrb[0].mxu0
  %v467 = vadd.f32 0.0, %v466
  %v468 = vpop.f32.mrb[0].mxu0
  %v469 = vpop.f32.mrb[0].mxu0
  %v470 = vpop.f32.mrb[0].mxu0
  %471 = vdwg.mxu0
  %472 = vmatprep.subr.bf16.mxu0 0
  %473 = vmatpush1.bf16.msra.mxu0 %v352
  %474 = vmatprep.subr.bf16.mxu0 0
  %475 = vmatpush1.bf16.msra.mxu0 %v353
  %476 = vmatprep.subr.bf16.mxu0 0
  %477 = vmatpush1.bf16.msra.mxu0 %v354
  %478 = vmatprep.subr.bf16.mxu0 0
  %479 = vmatpush1.bf16.msra.mxu0 %v355
  %480 = vmatprep.subr.bf16.mxu0 0
  %481 = vmatpush1.bf16.msra.mxu0 %v356
  %482 = vmatprep.subr.bf16.mxu0 0
  %483 = vmatpush1.bf16.msra.mxu0 %v357
  %484 = vmatprep.subr.bf16.mxu0 0
  %485 = vmatpush1.bf16.msra.mxu0 %v358
  %486 = vmatprep.subr.bf16.mxu0 0
  %487 = vmatpush1.bf16.msra.mxu0 %v359
  %488 = vmatprep.subr.bf16.mxu0 0
  %489 = vmatpush1.bf16.msra.mxu0 %v360
  %490 = vmatprep.subr.bf16.mxu0 0
  %491 = vmatpush1.bf16.msra.mxu0 %v361
  %492 = vmatprep.subr.bf16.mxu0 0
  %493 = vmatpush1.bf16.msra.mxu0 %v362
  %494 = vmatprep.subr.bf16.mxu0 0
  %495 = vmatpush1.bf16.msra.mxu0 %v363
  %496 = vmatprep.subr.bf16.mxu0 0
  %497 = vmatpush1.bf16.msra.mxu0 %v364
  %498 = vmatprep.subr.bf16.mxu0 0
  %499 = vmatpush1.bf16.msra.mxu0 %v365
  %500 = vmatprep.subr.bf16.mxu0 0
  %501 = vmatpush1.bf16.msra.mxu0 %v366
  %502 = vmatprep.subr.bf16.mxu0 0
  %503 = vmatpush1.bf16.msra.mxu0 %v367
  %504 = vmatprep.mubr.bf16.mxu0 %v135
  %505 = vmatmul.mubr.bf16.gmra.mrb[0].mxu0 %v134
  %v506 = vpop.f32.mrb[0].mxu0
  %v507 = vadd.f32 %v467, %v506
  %v508 = vpop.f32.mrb[0].mxu0
  %v509 = vpop.f32.mrb[0].mxu0
  %v510 = vpop.f32.mrb[0].mxu0
  %511 = vdwg.mxu0
  %512 = vmatprep.subr.bf16.mxu0 0
  %513 = vmatpush1.bf16.msra.mxu0 %v368
  %514 = vmatprep.subr.bf16.mxu0 0
  %515 = vmatpush1.bf16.msra.mxu0 %v369
  %516 = vmatprep.subr.bf16.mxu0 0
  %517 = vmatpush1.bf16.msra.mxu0 %v370
  %518 = vmatprep.subr.bf16.mxu0 0
  %519 = vmatpush1.bf16.msra.mxu0 %v371
  %520 = vmatprep.subr.bf16.mxu0 0
  %521 = vmatpush1.bf16.msra.mxu0 %v372
  %522 = vmatprep.subr.bf16.mxu0 0
  %523 = vmatpush1.bf16.msra.mxu0 %v373
  %524 = vmatprep.subr.bf16.mxu0 0
  %525 = vmatpush1.bf16.msra.mxu0 %v374
  %526 = vmatprep.subr.bf16.mxu0 0
  %527 = vmatpush1.bf16.msra.mxu0 %v375
  %528 = vmatprep.subr.bf16.mxu0 0
  %529 = vmatpush1.bf16.msra.mxu0 %v376
  %530 = vmatprep.subr.bf16.mxu0 0
  %531 = vmatpush1.bf16.msra.mxu0 %v377
  %532 = vmatprep.subr.bf16.mxu0 0
  %533 = vmatpush1.bf16.msra.mxu0 %v378
  %534 = vmatprep.subr.bf16.mxu0 0
  %535 = vmatpush1.bf16.msra.mxu0 %v379
  %536 = vmatprep.subr.bf16.mxu0 0
  %537 = vmatpush1.bf16.msra.mxu0 %v380
  %538 = vmatprep.subr.bf16.mxu0 0
  %539 = vmatpush1.bf16.msra.mxu0 %v381
  %540 = vmatprep.subr.bf16.mxu0 0
  %541 = vmatpush1.bf16.msra.mxu0 %v382
  %542 = vmatprep.subr.bf16.mxu0 0
  %543 = vmatpush1.bf16.msra.mxu0 %v383
  %544 = vmatprep.mubr.bf16.mxu0 %v137
  %545 = vmatmul.mubr.bf16.gmra.mrb[0].mxu0 %v136
  %v546 = vpop.f32.mrb[0].mxu0
  %v547 = vadd.f32 %v507, %v546
  %v548 = vpop.f32.mrb[0].mxu0
  %v549 = vpop.f32.mrb[0].mxu0
  %v550 = vpop.f32.mrb[0].mxu0
  %551 = vdwg.mxu0
  %v552 = vadd.f32 %v23, %v547
  %553 = vst [vmem:[#allocation2] sm:$0xff] %v552
  // Predicated region
  $region22: #{clip_loss_forward.1} parent=0 // pred_check
    %p554 = pneg %p18
  $region23: #{clip_loss_forward.1} parent=0 // pred_check_branch
    %556 = sbr.rel (%p554) target = $region25
  $region24: #{clip_loss_forward.1} parent=0 // pred_region
    %v557 = vld [vmem:[#allocation2] sm:$0xff]
    %v558 = vld [vmem:[%s2] sm:$0x1]
    %v560 = vlaneseq
    %v561 = vshrl.u32 %v560, 7
    %v562 = vsub.s32 0, %v561
    %v563 = vrot.slane %v558, %v562
    %v565 = vadd.f32 %v557, %v563
    %v566 = vmul.f32 %v565, %v565
    %567 = vadd.xlane.f32.xlu0 %v566
    %v568 = vpop.xlane.xlu0 %567
    %v569 = vadd.f32 %v568, 1e-12
    %v570 = vrsqrt.pop %v569
    %v571 = vmul.f32 %v565, %v570
    %v572 = vpack.c.bf16 %v571, %v571
    %v573 = vld [vmem:[%s3] sm:$0xf]
    %v574 = vld [vmem:[%s3 + $0x4] sm:$0xf]
    %v575 = vld [vmem:[%s3 + $0x8] sm:$0xf]
    %v576 = vld [vmem:[%s3 + $0xc] sm:$0xf]
    %v577 = vld [vmem:[%s3 + $0x10] sm:$0xf]
    %v578 = vld [vmem:[%s3 + $0x14] sm:$0xf]
    %v579 = vld [vmem:[%s3 + $0x18] sm:$0xf]
    %v580 = vld [vmem:[%s3 + $0x1c] sm:$0xf]
    %v581 = vld [vmem:[%s3 + $0x20] sm:$0xf]
    %v582 = vld [vmem:[%s3 + $0x24] sm:$0xf]
    %v583 = vld [vmem:[%s3 + $0x28] sm:$0xf]
    %v584 = vld [vmem:[%s3 + $0x2c] sm:$0xf]
    %v585 = vld [vmem:[%s3 + $0x30] sm:$0xf]
    %v586 = vld [vmem:[%s3 + $0x34] sm:$0xf]
    %v587 = vld [vmem:[%s3 + $0x38] sm:$0xf]
    %v588 = vld [vmem:[%s3 + $0x3c] sm:$0xf]
    %v605 = vunpack.c.l.b16 %v573
    %v606 = vunpack.c.l.b16 %v574
    %v607 = vunpack.c.l.b16 %v575
    %v608 = vunpack.c.l.b16 %v576
    %v609 = vunpack.c.l.b16 %v577
    %v610 = vunpack.c.l.b16 %v578
    %v611 = vunpack.c.l.b16 %v579
    %v612 = vunpack.c.l.b16 %v580
    %v613 = vunpack.c.l.b16 %v581
    %v614 = vunpack.c.l.b16 %v582
    %v615 = vunpack.c.l.b16 %v583
    %v616 = vunpack.c.l.b16 %v584
    %v617 = vunpack.c.l.b16 %v585
    %v618 = vunpack.c.l.b16 %v586
    %v619 = vunpack.c.l.b16 %v587
    %v620 = vunpack.c.l.b16 %v588
    %v621 = vpack.c.b16 %v606, %v605
    %v622 = vpack.c.b16 %v608, %v607
    %v623 = vpack.c.b16 %v610, %v609
    %v624 = vpack.c.b16 %v612, %v611
    %v625 = vpack.c.b16 %v614, %v613
    %v626 = vpack.c.b16 %v616, %v615
    %v627 = vpack.c.b16 %v618, %v617
    %v628 = vpack.c.b16 %v620, %v619
    %637 = vmatprep.subr.bf16.mxu0 0
    %638 = vmatpush1.bf16.msra.mxu0 %v621
    %639 = vmatprep.subr.bf16.mxu0 0
    %640 = vmatpush1.bf16.msra.mxu0 %v622
    %641 = vmatprep.subr.bf16.mxu0 0
    %642 = vmatpush1.bf16.msra.mxu0 %v623
    %643 = vmatprep.subr.bf16.mxu0 0
    %644 = vmatpush1.bf16.msra.mxu0 %v624
    %645 = vmatprep.subr.bf16.mxu0 0
    %646 = vmatpush1.bf16.msra.mxu0 %v625
    %647 = vmatprep.subr.bf16.mxu0 0
    %648 = vmatpush1.bf16.msra.mxu0 %v626
    %649 = vmatprep.subr.bf16.mxu0 0
    %650 = vmatpush1.bf16.msra.mxu0 %v627
    %651 = vmatprep.subr.bf16.mxu0 0
    %652 = vmatpush1.bf16.msra.mxu0 %v628
    %653 = vmatprep.subr.bf16.mxu0 0
    %654 = vmatpush1.bf16.msra.mxu0 0
    %655 = vmatprep.subr.bf16.mxu0 0
    %656 = vmatpush1.bf16.msra.mxu0 0
    %657 = vmatprep.subr.bf16.mxu0 0
    %658 = vmatpush1.bf16.msra.mxu0 0
    %659 = vmatprep.subr.bf16.mxu0 0
    %660 = vmatpush1.bf16.msra.mxu0 0
    %661 = vmatprep.subr.bf16.mxu0 0
    %662 = vmatpush1.bf16.msra.mxu0 0
    %663 = vmatprep.subr.bf16.mxu0 0
    %664 = vmatpush1.bf16.msra.mxu0 0
    %665 = vmatprep.subr.bf16.mxu0 0
    %666 = vmatpush1.bf16.msra.mxu0 0
    %667 = vmatprep.subr.bf16.mxu0 0
    %668 = vmatpush1.bf16.msra.mxu0 0
    %669 = vmatprep.mubr.bf16.mxu0 0
    %670 = vmatmul.mubr.bf16.gmra.mrb[0].mxu0 %v572
    %v671 = vpop.f32.mrb[0].mxu0
    %v672 = vadd.f32 0.0, %v671
    %v673 = vpop.f32.mrb[0].mxu0
    %v674 = vpop.f32.mrb[0].mxu0
    %v675 = vpop.f32.mrb[0].mxu0
    %676 = vdwg.mxu0
    %677 = vst [vmem:[%s4] sm:$0xff] %v672
  $region25: #{clip_loss_forward.1} parent=0 // pred_fallthru
    _
  // Predicated region
  $region26: #{clip_loss_forward.1} parent=0 // pred_check
    _
  $region27: #{clip_loss_forward.1} parent=0 // pred_check_branch
    %679 = sbr.rel (0) target = $region29
  $region28: #{clip_loss_forward.1} parent=0 // pred_region
    _
  $region29: #{clip_loss_forward.1} parent=0 // pred_fallthru
    _
  // Predicated region
  $region30: #{clip_loss_forward.1} parent=0 // pred_check
    _
  $region31: #{clip_loss_forward.1} parent=0 // pred_check_branch
    %681 = sbr.rel (0) target = $region33
  $region32: #{clip_loss_forward.1} parent=0 // pred_region
    _
  $region33: #{clip_loss_forward.1} parent=0 // pred_fallthru
    _

</llo_original>
